<compile_context>
chip_gen: v7x
topology: tpu7x:2x2x1
jax: 0.10.0
libtpu: 0.0.40
codegen_flags: <defaults>
</compile_context>

<pallas_src>
import functools
from typing import NamedTuple

import jax
import jax.numpy as jnp
from jax.experimental import pallas as pl
from jax.experimental.pallas import tpu as pltpu


# --------------------------------------------------------------------------- #
# helpers
# --------------------------------------------------------------------------- #
def _round_up(v, m):
    return (v + m - 1) // m * m


def _cdiv(a, b):
    return (a + b - 1) // b


def _row_multiple(dtype):
    # sublane packing: 8 rows for 4-byte, 16 for 2-byte, 32 for 1-byte dtypes
    return max(8, 32 // jnp.dtype(dtype).itemsize)


def _vmem_capacity_bytes():
    try:
        return int(pltpu.get_tpu_info().vmem_capacity_bytes)
    except Exception:
        return 64 * 1024 * 1024  # conservative (v7x-sized) fallback


def _vmem_need(tb, tk, tn, it_x, it_c, it_o, *, with_acc, dup_x):
    """Rough double-buffered VMEM footprint of one grid step (bytes)."""
    need = 2 * (tb * tk * it_x            # x block for the matmul
                + tk * 2 * tn * it_c      # fused [W_H | W_T] weight block
                + 2 * tn * 4              # fused bias block (f32)
                + tb * tn * it_o)         # output block
    if dup_x:
        need += 2 * tb * tn * it_x        # residual x block (tiled path only)
    if with_acc:
        need += tb * 2 * tn * 4           # f32 accumulator scratch
    need += tb * 2 * tn * 4               # epilogue temporaries (lin / h / t)
    return need


def _select_tiles(H, it_x, it_c, it_o, tb_max, tile_n, tile_k, budget):
    """Pick (tk, tn, resident). Prefers the fully weight-resident schedule."""
    H128 = _round_up(H, 128)

    # 1) fully weight-resident: tk = tn = H128, single fused dot, single x stream
    if _vmem_need(tb_max, H128, H128, it_x, it_c, it_o,
                  with_acc=False, dup_x=False) <= budget:
        return H128, H128, True

    # 2) tiled fallback: prefer a full-K dot (kills the accumulator RMW), shrink K
    tn = min(_round_up(tile_n, 128), H128)
    cands = []
    for c in (H128, _round_up(min(tile_k, H128), 128), 512, 256, 128):
        c = min(c, H128)
        if c not in cands:
            cands.append(c)
    for tk in cands:
        if _vmem_need(tb_max, tk, tn, it_x, it_c, it_o,
                      with_acc=True, dup_x=True) <= budget:
            return tk, tn, False
    # 3) shrink N as well; final fallback is the minimal lane-dense tile
    for tn2 in (256, 128):
        tn2 = min(tn2, H128)
        if _vmem_need(tb_max, 128, tn2, it_x, it_c, it_o,
                      with_acc=True, dup_x=True) <= budget:
            return 128, tn2, False
    return 128, 128, False


# --------------------------------------------------------------------------- #
# prepared (cached) layer parameters
# --------------------------------------------------------------------------- #
class HighwayParams(NamedTuple):
    w_cat: jax.Array       # (H_k, (H_n // tn) * 2 * tn), MXU dtype, interleaved [W_H|W_T]
    b_cat: jax.Array       # (1,   (H_n // tn) * 2 * tn), f32, interleaved [b_H|b_T]
    H: int
    H_k: int               # reduction-dim padding of H (multiple of tk)
    H_n: int               # output-dim padding of H (multiple of tn)
    tk: int
    tn: int
    tb_max: int
    resident: bool
    approx_recip: bool
    vmem_cap: int


def prepare_highway_params(w_h, b_h, w_t, b_t, *,
                           mxu_dtype=jnp.bfloat16,
                           x_dtype=jnp.float32,
                           approx_recip=True,
                           tile_b=512, tile_n=512, tile_k=512,
                           vmem_budget=None):
    """Fuse / pad / cast the layer weights ONCE; cache the result and reuse per forward.

    w_h, w_t: [H, H] in PyTorch nn.Linear [out, in] layout; b_h, b_t: [H].
    mxu_dtype: dtype of the MXU operands (bf16 recommended on v6e/v7x); the
               accumulation, activations and residual blend are always f32.
    """
    w_h = jnp.asarray(w_h); w_t = jnp.asarray(w_t)
    b_h = jnp.asarray(b_h); b_t = jnp.asarray(b_t)
    H = w_h.shape[0]
    assert w_h.shape == (H, H) and w_t.shape == (H, H)
    assert b_h.shape == (H,) and b_t.shape == (H,)

    compute_dtype = jnp.dtype(mxu_dtype)
    it_c = compute_dtype.itemsize
    it_x = jnp.dtype(x_dtype).itemsize
    it_o = it_x

    cap = _vmem_capacity_bytes()
    budget = int(vmem_budget) if vmem_budget is not None else int(0.7 * cap)

    row_mult = _row_multiple(x_dtype)
    tb_max = _round_up(max(int(tile_b), row_mult), row_mult)
    tk, tn, resident = _select_tiles(H, it_x, it_c, it_o, tb_max, tile_n, tile_k, budget)

    H_k = _round_up(H, tk)   # reduction-dim padding
    H_n = _round_up(H, tn)   # output-dim padding (decoupled from H_k)
    n_tiles = H_n // tn

    # PyTorch stores W as [out, in]; the kernel computes x @ W.T, so transpose here.
    wh_p = jnp.pad(w_h.T.astype(compute_dtype), ((0, H_k - H), (0, H_n - H)))
    wt_p = jnp.pad(w_t.T.astype(compute_dtype), ((0, H_k - H), (0, H_n - H)))
    # Interleave per N-tile so each grid-j weight slab is [W_H tile | W_T tile].
    w_cat = jnp.stack(
        (wh_p.reshape(H_k, n_tiles, tn), wt_p.reshape(H_k, n_tiles, tn)), axis=2
    ).reshape(H_k, n_tiles * 2 * tn)

    bh_p = jnp.pad(b_h.astype(jnp.float32), (0, H_n - H))
    bt_p = jnp.pad(b_t.astype(jnp.float32), (0, H_n - H))
    b_cat = jnp.stack(
        (bh_p.reshape(n_tiles, tn), bt_p.reshape(n_tiles, tn)), axis=1
    ).reshape(1, n_tiles * 2 * tn)

    return HighwayParams(w_cat=w_cat, b_cat=b_cat, H=H, H_k=H_k, H_n=H_n,
                         tk=tk, tn=tn, tb_max=tb_max, resident=bool(resident),
                         approx_recip=bool(approx_recip), vmem_cap=cap)


# --------------------------------------------------------------------------- #
# kernels
# --------------------------------------------------------------------------- #
def _highway_kernel_resident(x_ref, w_ref, b_ref, o_ref, *, approx):
    """Whole layer in one fused dot: weight columns [0:tn) are W_H, [tn:2tn) are W_T."""
    xin = x_ref[...]
    lin = jnp.dot(xin.astype(w_ref.dtype), w_ref[...],
                  preferred_element_type=jnp.float32) + b_ref[...]
    tn = o_ref.shape[1]
    h = jnp.maximum(lin[:, :tn], 0.0)                             # ReLU branch
    # sigmoid via exp + EUP reciprocal (keeps the divide off the VALU)
    t = pl.reciprocal(1.0 + jnp.exp(-lin[:, tn:]), approx=approx)  # gate branch
    xr = xin.astype(jnp.float32)                                   # residual (same block)
    o_ref[...] = (h * t + xr * (1.0 - t)).astype(o_ref.dtype)


def _highway_kernel_tiled(x_mm_ref, w_ref, b_ref, x_res_ref, o_ref, acc_ref, *, approx):
    """(i, j, k) grid step with an f32 K accumulator; epilogue only on the last k step."""
    k = pl.program_id(2)

    @pl.when(k == 0)
    def _init():
        acc_ref[...] = jnp.zeros_like(acc_ref)

    acc_ref[...] += jnp.dot(x_mm_ref[...].astype(w_ref.dtype), w_ref[...],
                            preferred_element_type=jnp.float32)

    @pl.when(k == pl.num_programs(2) - 1)
    def _finalize():
        tn = o_ref.shape[1]
        lin = acc_ref[...] + b_ref[...]                # bias added once, in f32
        h = jnp.maximum(lin[:, :tn], 0.0)
        t = pl.reciprocal(1.0 + jnp.exp(-lin[:, tn:]), approx=approx)
        xr = x_res_ref[...].astype(jnp.float32)
        o_ref[...] = (h * t + xr * (1.0 - t)).astype(o_ref.dtype)


# --------------------------------------------------------------------------- #
# forward
# --------------------------------------------------------------------------- #
def one_highway_layer(x, params: HighwayParams):
    """Highway layer forward. x: [..., H] with H == params.H."""
    orig_shape = x.shape
    H = params.H
    assert orig_shape[-1] == H, f"last dim {orig_shape[-1]} != prepared H={H}"
    x2d = x.reshape(-1, H)
    B = x2d.shape[0]
    out_dtype = x.dtype

    it_x = jnp.dtype(x.dtype).itemsize
    it_c = jnp.dtype(params.w_cat.dtype).itemsize
    it_o = it_x

    # ---- adaptive batch tiling (padding < one sublane group) ----------------
    row_mult = _row_multiple(x.dtype)
    B_pad0 = _round_up(B, row_mult)
    nb = _cdiv(B_pad0, params.tb_max)
    if params.resident and nb == 1 and B_pad0 >= 4 * row_mult:
        nb = 2   # feed both TensorCores on dual-TC chips (v7x); near-free elsewhere
    tb = _round_up(_cdiv(B_pad0, nb), row_mult)
    B_pad = nb * tb

    H_k, H_n, tk, tn = params.H_k, params.H_n, params.tk, params.tn
    n_tiles, k_tiles = H_n // tn, H_k // tk

    # Single padded x array; both the matmul and residual windows view it.
    H_x = max(H_k, H_n)
    x_p = jnp.pad(x2d, ((0, B_pad - B), (0, H_x - H)))

    if params.resident:
        kernel = functools.partial(_highway_kernel_resident, approx=params.approx_recip)
        need = _vmem_need(tb, tk, tn, it_x, it_c, it_o, with_acc=False, dup_x=False)
        cost = pl.CostEstimate(
            flops=2 * B_pad * H_k * 2 * H_n + 8 * B_pad * H_n,
            transcendentals=B_pad * H_n,
            bytes_accessed=(B_pad * H_x * it_x + B_pad * H_n * it_o
                            + H_k * 2 * H_n * it_c + 2 * H_n * 4))
        grid_spec = pltpu.PrefetchScalarGridSpec(
            num_scalar_prefetch=0,
            grid=(nb,),
            in_specs=[
                pl.BlockSpec((tb, tk), lambda i: (i, 0)),       # x (matmul + residual)
                pl.BlockSpec((tk, 2 * tn), lambda i: (0, 0)),   # resident fused weights
                pl.BlockSpec((1, 2 * tn), lambda i: (0, 0)),    # fused bias
            ],
            out_specs=pl.BlockSpec((tb, tn), lambda i: (i, 0)),
        )
        dims = ("parallel",)
        operands = (x_p, params.w_cat, params.b_cat)
    else:
        kernel = functools.partial(_highway_kernel_tiled, approx=params.approx_recip)
        need = _vmem_need(tb, tk, tn, it_x, it_c, it_o, with_acc=True, dup_x=True)
        cost = pl.CostEstimate(
            flops=2 * B_pad * H_k * 2 * H_n + 8 * B_pad * H_n,
            transcendentals=B_pad * H_n,
            bytes_accessed=(B_pad * H_k * it_x * n_tiles        # x matmul stream (re-fetched per j)
                            + B_pad * H_n * it_x                # x residual stream
                            + nb * H_k * 2 * H_n * it_c         # weights re-fetched per batch tile
                            + nb * n_tiles * 2 * tn * 4
                            + B_pad * H_n * it_o))
        grid_spec = pltpu.PrefetchScalarGridSpec(
            num_scalar_prefetch=0,
            grid=(nb, n_tiles, k_tiles),
            in_specs=[
                pl.BlockSpec((tb, tk), lambda i, j, k: (i, k)),      # x for the matmul
                pl.BlockSpec((tk, 2 * tn), lambda i, j, k: (k, j)),  # fused weight slab
                pl.BlockSpec((1, 2 * tn), lambda i, j, k: (0, j)),   # fused bias slab
                pl.BlockSpec((tb, tn), lambda i, j, k: (i, j)),      # x for the residual blend
            ],
            out_specs=pl.BlockSpec((tb, tn), lambda i, j, k: (i, j)),
            scratch_shapes=[pltpu.VMEM((tb, 2 * tn), jnp.float32)],
        )
        dims = ("parallel", "parallel", "arbitrary")
        operands = (x_p, params.w_cat, params.b_cat, x_p)   # same array, two windows

    # Generation-aware VMEM cap (128 MiB-class on v5e/v6e, 64 MiB-class on v7x).
    vmem_limit = int(min(int(0.92 * params.vmem_cap),
                         max(32 * 1024 * 1024, int(1.4 * need))))

    out_pad = pl.pallas_call(
        kernel,
        out_shape=jax.ShapeDtypeStruct((B_pad, H_n), out_dtype),
        grid_spec=grid_spec,
        compiler_params=pltpu.CompilerParams(
            dimension_semantics=dims,
            vmem_limit_bytes=vmem_limit),
        cost_estimate=cost,
    )(*operands)

    return out_pad[:B, :H].reshape(orig_shape)


# --------------------------------------------------------------------------- #
# reference & demo
# --------------------------------------------------------------------------- #
def reference(x, w_h, b_h, w_t, b_t):
    t = jax.nn.sigmoid(x @ w_t.T + b_t)
    h = jnp.maximum(x @ w_h.T + b_h, 0.0)
    return h * t + x * (1.0 - t)


if __name__ == "__main__":
    batch = 8
    hidden = 32          # input_size == hidden_size for this module's forward
    bias_T = -1.0

    key = jax.random.PRNGKey(0)
    kx, kwh, kbh, kwt = jax.random.split(key, 4)

    # Deterministic synthetic parameters (nn.Linear(hidden, hidden) shapes).
    x = jax.random.normal(kx, (batch, hidden), dtype=jnp.float32)
    w_h = jax.random.normal(kwh, (hidden, hidden), dtype=jnp.float32) * 0.1
    b_h = jax.random.normal(kbh, (hidden,), dtype=jnp.float32) * 0.1
    w_t = jax.random.normal(kwt, (hidden, hidden), dtype=jnp.float32) * 0.1
    b_t = jnp.full((hidden,), bias_T, dtype=jnp.float32)   # T.bias.data.fill_(bias_T)

    ref = reference(x, w_h, b_h, w_t, b_t)

    # 1) Exact f32 path on the weight-resident kernel, tight tolerance.
    p_f32 = prepare_highway_params(w_h, b_h, w_t, b_t,
                                   mxu_dtype=jnp.float32, approx_recip=False)
    assert p_f32.resident
    out = jax.block_until_ready(one_highway_layer(x, p_f32))
    assert out.shape == (batch, hidden)
    assert jnp.allclose(out, ref, atol=1e-5, rtol=1e-5), "f32 resident mismatch vs reference"

    # 2) Forced tiled path (small VMEM budget -> K accumulation + N tiling + decoupled padding).
    B2, H2 = 24, 200
    k2 = jax.random.split(jax.random.PRNGKey(1), 4)
    x2 = jax.random.normal(k2[0], (B2, H2), dtype=jnp.float32)
    wh2 = jax.random.normal(k2[1], (H2, H2), dtype=jnp.float32) * 0.05
    bh2 = jax.random.normal(k2[2], (H2,), dtype=jnp.float32) * 0.05
    wt2 = jax.random.normal(k2[3], (H2,), dtype=jnp.float32)[:, None] * 0.0  # placeholder, replaced below
    wt2 = jax.random.normal(k2[3], (H2, H2), dtype=jnp.float32) * 0.05
    bt2 = jnp.full((H2,), bias_T, dtype=jnp.float32)
    p_tiled = prepare_highway_params(
        wh2, bh2, wt2, bt2, mxu_dtype=jnp.float32, approx_recip=False,
        tile_b=8, tile_n=128, tile_k=128, vmem_budget=512 * 1024)
    assert not p_tiled.resident and p_tiled.H_k // p_tiled.tk > 1
    out2 = jax.block_until_ready(one_highway_layer(x2, p_tiled))
    ref2 = reference(x2, wh2, bh2, wt2, bt2)
    assert jnp.allclose(out2, ref2, atol=1e-4, rtol=1e-4), "tiled mismatch vs reference"

    # 3) Default path: bf16 MXU operands + EUP approx reciprocal (f32 accumulate/epilogue).
    p_bf16 = prepare_highway_params(w_h, b_h, w_t, b_t)
    out_bf16 = jax.block_until_ready(one_highway_layer(x, p_bf16))
    assert jnp.allclose(out_bf16, ref, atol=5e-2, rtol=5e-2), "bf16 mismatch vs reference"

    # 4) Odd shapes on the resident path (adaptive tb split + 128-padding of H).
    B4 = 50
    x4 = jax.random.normal(jax.random.PRNGKey(2), (B4, H2), dtype=jnp.float32)
    p4 = prepare_highway_params(wh2, bh2, wt2, bt2,
                                mxu_dtype=jnp.float32, approx_recip=False)
    out4 = jax.block_until_ready(one_highway_layer(x4, p4))
    ref4 = reference(x4, wh2, bh2, wt2, bt2)
    assert jnp.allclose(out4, ref4, atol=1e-4, rtol=1e-4), "padded resident mismatch vs reference"

    print("KERNEL_OK")
</pallas_src>

<mosaic_0001>
module attributes {stable_mosaic.version = 11 : i64} {
  func.func @_highway_kernel_resident(%arg0: i32, %arg1: memref<8x128xf32, #tpu.memory_space<vmem>>, %arg2: memref<128x256xf32, #tpu.memory_space<vmem>>, %arg3: memref<1x256xf32, #tpu.memory_space<vmem>>, %arg4: memref<8x128xf32, #tpu.memory_space<vmem>>) attributes {dimension_semantics = [#tpu.dimension_semantics<parallel>], iteration_bounds = array<i64: 1>, scalar_prefetch = 0 : i64, scratch_operands = 0 : i64, tpu.core_type = #tpu.core_type<tc>, window_params = [{transform_indices = @transform_0, window_bounds = array<i64: 8, 128>}, {pipeline_mode = #tpu.pipeline_mode<synchronous>, transform_indices = @transform_1, window_bounds = array<i64: 128, 256>}, {pipeline_mode = #tpu.pipeline_mode<synchronous>, transform_indices = @transform_2, window_bounds = array<i64: 1, 256>}, {transform_indices = @transform_3, window_bounds = array<i64: 8, 128>}]} {
    %c0 = arith.constant 0 : index
    %c0_0 = arith.constant 0 : index
    %0 = vector.load %arg1[%c0, %c0_0] : memref<8x128xf32, #tpu.memory_space<vmem>>, vector<8x128xf32>
    %c0_1 = arith.constant 0 : index
    %c0_2 = arith.constant 0 : index
    %1 = vector.load %arg2[%c0_1, %c0_2] : memref<128x256xf32, #tpu.memory_space<vmem>>, vector<128x256xf32>
    %cst = arith.constant dense<0.000000e+00> : vector<8x256xf32>
    %2 = tpu.matmul %0, %1, %cst {dimension_numbers = #tpu.dot_dimension_numbers<[1], [0], [0], [1], [0, 0, 1, 1], [], []>} : vector<8x128xf32>, vector<128x256xf32>, vector<8x256xf32> -> vector<8x256xf32>
    %c0_3 = arith.constant 0 : index
    %c0_4 = arith.constant 0 : index
    %3 = vector.load %arg3[%c0_3, %c0_4] : memref<1x256xf32, #tpu.memory_space<vmem>>, vector<1x256xf32>
    %4 = vector.broadcast %3 : vector<1x256xf32> to vector<8x256xf32>
    %5 = arith.addf %2, %4 : vector<8x256xf32>
    %6 = vector.extract_strided_slice %5 {offsets = [0, 0], sizes = [8, 128], strides = [1, 1]} : vector<8x256xf32> to vector<8x128xf32>
    %cst_5 = arith.constant 0.000000e+00 : f32
    %7 = vector.broadcast %cst_5 : f32 to vector<8x128xf32>
    %8 = arith.maximumf %6, %7 : vector<8x128xf32>
    %9 = vector.extract_strided_slice %5 {offsets = [0, 128], sizes = [8, 128], strides = [1, 1]} : vector<8x256xf32> to vector<8x128xf32>
    %cst_6 = arith.constant 0.000000e+00 : f32
    %10 = vector.broadcast %cst_6 : f32 to vector<8x128xf32>
    %11 = arith.subf %10, %9 : vector<8x128xf32>
    %12 = math.exp %11 : vector<8x128xf32>
    %cst_7 = arith.constant 1.000000e+00 : f32
    %13 = vector.broadcast %cst_7 : f32 to vector<8x128xf32>
    %14 = arith.addf %13, %12 : vector<8x128xf32>
    %15 = tpu.reciprocal %14 : vector<8x128xf32> -> vector<8x128xf32>
    %16 = arith.mulf %8, %15 : vector<8x128xf32>
    %cst_8 = arith.constant 1.000000e+00 : f32
    %17 = vector.broadcast %cst_8 : f32 to vector<8x128xf32>
    %18 = arith.subf %17, %15 : vector<8x128xf32>
    %19 = arith.mulf %0, %18 : vector<8x128xf32>
    %20 = arith.addf %16, %19 : vector<8x128xf32>
    %c0_9 = arith.constant 0 : index
    %c0_10 = arith.constant 0 : index
    %21 = vector.load %arg4[%c0_9, %c0_10] : memref<8x128xf32, #tpu.memory_space<vmem>>, vector<8x128xf32>
    tpu.vector_store %arg4[%c0_9, %c0_10], %20 {strides = array<i32>} : memref<8x128xf32, #tpu.memory_space<vmem>>, vector<8x128xf32>,
    return
  }
  func.func @transform_0(%arg0: i32) -> (i32, i32) {
    %c0_i32 = arith.constant 0 : i32
    %c0_i32_0 = arith.constant 0 : i32
    return %arg0, %c0_i32 : i32, i32
  }
  func.func @transform_1(%arg0: i32) -> (i32, i32) {
    %c0_i32 = arith.constant 0 : i32
    %c0_i32_0 = arith.constant 0 : i32
    %c0_i32_1 = arith.constant 0 : i32
    return %c0_i32, %c0_i32_0 : i32, i32
  }
  func.func @transform_2(%arg0: i32) -> (i32, i32) {
    %c0_i32 = arith.constant 0 : i32
    %c0_i32_0 = arith.constant 0 : i32
    %c0_i32_1 = arith.constant 0 : i32
    return %c0_i32, %c0_i32_0 : i32, i32
  }
  func.func @transform_3(%arg0: i32) -> (i32, i32) {
    %c0_i32 = arith.constant 0 : i32
    %c0_i32_0 = arith.constant 0 : i32
    return %arg0, %c0_i32 : i32, i32
  }
}

</mosaic_0001>

<llo_original>
// kernel: tpu_custom_call.1
$region0: #{tpu_custom_call.1}
  #allocation0 [shape = 'u32[]', space=smem, size = 0x4, offset = 0x4, fixed_abs, tag = 'smem constant byte address 0x4 - core index']
  #allocation1 [shape = 'u32[144,128]{1,0:T(1,128)}', space=vmem, size = 0x12000, scoped, tag = 'internal scratch']
  %s0 = inlined_call_operand.hbm [shape: f32[8,128], index: 0, kind: input, shape index: {}]
  %s1 = inlined_call_operand.hbm [shape: f32[128,256], index: 1, kind: input, shape index: {}]
  %s2 = inlined_call_operand.vmem [shape: f32[1,256], index: 2, kind: input, shape index: {}]
  %s3 = inlined_call_operand.hbm [shape: f32[8,128], index: 3, kind: output, shape index: {}]
  %s4 = sld [smem:[#allocation0]]
  $region30: #{tpu_custom_call.1} parent=0
    _
  %s6 = ssub.s32 1, %s4
  %s7 = scalar_select 0, %s6, %s4
  $region1: #{tpu_custom_call.1} parent=0
    #allocation2 [shape = 'u8[4096]{0}', space=vmem, size = 0x1000, scoped, tag = 'input window, operand 0, single buffered']
    #allocation3 [shape = 's32[1]{0}', space=sflag, size = 0x4, scoped, tag = 'scoped memory for tpu_custom_call.1']
    #allocation4 [shape = 's32[1]{0}', space=sflag, size = 0x4, scoped, tag = 'scoped memory for tpu_custom_call.1']
    #allocation5 [shape = 'u8[131072]{0}', space=vmem, size = 0x20000, scoped, tag = 'input window, operand 1, single buffered']
    #allocation6 [shape = 's32[1]{0}', space=sflag, size = 0x4, scoped, tag = 'scoped memory for tpu_custom_call.1']
    #allocation7 [shape = 'u8[4096]{0}', space=vmem, size = 0x1000, scoped, tag = 'output window, operand 0, single buffered']
    %8 = vsyncpa [#allocation3], 0
    %9 = vsyncpa [#allocation6], 0
    %10 = vsyncpa [#allocation4], 0
    // Predicated region
    $region2: #{tpu_custom_call.1} parent=1 // pred_check
      _
    $region3: #{tpu_custom_call.1} parent=1 // pred_check_branch
      %12 = sbr.rel (0) target = $region5
    $region4: #{tpu_custom_call.1} parent=1 // pred_region
      %s14 = ssub.s32 128, 128
      %15 = vsyncadd [#allocation3], %s14
      %s17 = sshll.u32 [#allocation2], 4
      %s18 = int_to_ptr.vmem [resolvable:$true] %s17
      %20 = dma.hbm_to_vmem [thread:$0]  %s0, 128, %s18, [#allocation3]
    $region5: #{tpu_custom_call.1} parent=1 // pred_fallthru
      _
    // Predicated region
    $region6: #{tpu_custom_call.1} parent=1 // pred_check
      _
    $region7: #{tpu_custom_call.1} parent=1 // pred_check_branch
      %22 = sbr.rel (0) target = $region9
    $region8: #{tpu_custom_call.1} parent=1 // pred_region
      %s24 = ssub.s32 4096, 4096
      %25 = vsyncadd [#allocation6], %s24
      %s26 = sshll.u32 [#allocation5], 4
      %s27 = int_to_ptr.vmem [resolvable:$true] %s26
      %32 = dma.hbm_to_vmem [thread:$0]  %s1, 4096, %s27, [#allocation6], 256, 256, 16
    $region9: #{tpu_custom_call.1} parent=1 // pred_fallthru
      _
    // Predicated region
    $region10: #{tpu_custom_call.1} parent=1 // pred_check
      _
    $region11: #{tpu_custom_call.1} parent=1 // pred_check_branch
      %34 = sbr.rel (0) target = $region13
    $region12: #{tpu_custom_call.1} parent=1 // pred_region
      _
    $region13: #{tpu_custom_call.1} parent=1 // pred_fallthru
      _
    // Predicated region
    $region14: #{tpu_custom_call.1} parent=1 // pred_check
      _
    $region15: #{tpu_custom_call.1} parent=1 // pred_check_branch
      %36 = sbr.rel (0) target = $region17
    $region16: #{tpu_custom_call.1} parent=1 // pred_region
      %37 = dma.done [#allocation3], 128
    $region17: #{tpu_custom_call.1} parent=1 // pred_fallthru
      _
    // Predicated region
    $region18: #{tpu_custom_call.1} parent=1 // pred_check
      _
    $region19: #{tpu_custom_call.1} parent=1 // pred_check_branch
      %39 = sbr.rel (0) target = $region21
    $region20: #{tpu_custom_call.1} parent=1 // pred_region
      %40 = dma.done [#allocation6], 4096
    $region21: #{tpu_custom_call.1} parent=1 // pred_fallthru
      _
    %v41 = vld [vmem:[#allocation2] sm:$0xff]
    %v42 = vld [vmem:[#allocation5] sm:$0xff]
    %v43 = vld [vmem:[#allocation5 + $0x8] sm:$0xff]
    %v44 = vld [vmem:[#allocation5 + $0x10] sm:$0xff]
    %v45 = vld [vmem:[#allocation5 + $0x18] sm:$0xff]
    %v46 = vld [vmem:[#allocation5 + $0x20] sm:$0xff]
    %v47 = vld [vmem:[#allocation5 + $0x28] sm:$0xff]
    %v48 = vld [vmem:[#allocation5 + $0x30] sm:$0xff]
    %v49 = vld [vmem:[#allocation5 + $0x38] sm:$0xff]
    %v50 = vld [vmem:[#allocation5 + $0x40] sm:$0xff]
    %v51 = vld [vmem:[#allocation5 + $0x48] sm:$0xff]
    %v52 = vld [vmem:[#allocation5 + $0x50] sm:$0xff]
    %v53 = vld [vmem:[#allocation5 + $0x58] sm:$0xff]
    %v54 = vld [vmem:[#allocation5 + $0x60] sm:$0xff]
    %v55 = vld [vmem:[#allocation5 + $0x68] sm:$0xff]
    %v56 = vld [vmem:[#allocation5 + $0x70] sm:$0xff]
    %v57 = vld [vmem:[#allocation5 + $0x78] sm:$0xff]
    %v58 = vld [vmem:[#allocation5 + $0x80] sm:$0xff]
    %v59 = vld [vmem:[#allocation5 + $0x88] sm:$0xff]
    %v60 = vld [vmem:[#allocation5 + $0x90] sm:$0xff]
    %v61 = vld [vmem:[#allocation5 + $0x98] sm:$0xff]
    %v62 = vld [vmem:[#allocation5 + $0xa0] sm:$0xff]
    %v63 = vld [vmem:[#allocation5 + $0xa8] sm:$0xff]
    %v64 = vld [vmem:[#allocation5 + $0xb0] sm:$0xff]
    %v65 = vld [vmem:[#allocation5 + $0xb8] sm:$0xff]
    %v66 = vld [vmem:[#allocation5 + $0xc0] sm:$0xff]
    %v67 = vld [vmem:[#allocation5 + $0xc8] sm:$0xff]
    %v68 = vld [vmem:[#allocation5 + $0xd0] sm:$0xff]
    %v69 = vld [vmem:[#allocation5 + $0xd8] sm:$0xff]
    %v70 = vld [vmem:[#allocation5 + $0xe0] sm:$0xff]
    %v71 = vld [vmem:[#allocation5 + $0xe8] sm:$0xff]
    %v72 = vld [vmem:[#allocation5 + $0xf0] sm:$0xff]
    %v73 = vld [vmem:[#allocation5 + $0xf8] sm:$0xff]
    %v74 = vld [vmem:[%s2] sm:$0x3]
    %v76 = vlaneseq
    %v77 = vshrl.u32 %v76, 7
    %v78 = vsub.s32 0, %v77
    %v79 = vrot.slane %v74, %v78
    %v80 = vlaneseq
    %v81 = vshrl.u32 %v80, 7
    %v82 = vsub.s32 1, %v81
    %v83 = vrot.slane %v74, %v82
    %86 = vmatprep.subr.mxu0 %v43
    %87 = vmatpush1.msra.mxu0 %v42
    %88 = vmatprep.subr.mxu0 %v45
    %89 = vmatpush1.msra.mxu0 %v44
    %90 = vmatprep.subr.mxu0 %v47
    %91 = vmatpush1.msra.mxu0 %v46
    %92 = vmatprep.subr.mxu0 %v49
    %93 = vmatpush1.msra.mxu0 %v48
    %94 = vmatprep.subr.mxu0 %v51
    %95 = vmatpush1.msra.mxu0 %v50
    %96 = vmatprep.subr.mxu0 %v53
    %97 = vmatpush1.msra.mxu0 %v52
    %98 = vmatprep.subr.mxu0 %v55
    %99 = vmatpush1.msra.mxu0 %v54
    %100 = vmatprep.subr.mxu0 %v57
    %101 = vmatpush1.msra.mxu0 %v56
    %102 = vmatprep.subr.mxu0 %v59
    %103 = vmatpush1.msra.mxu0 %v58
    %104 = vmatprep.subr.mxu0 %v61
    %105 = vmatpush1.msra.mxu0 %v60
    %106 = vmatprep.subr.mxu0 %v63
    %107 = vmatpush1.msra.mxu0 %v62
    %108 = vmatprep.subr.mxu0 %v65
    %109 = vmatpush1.msra.mxu0 %v64
    %110 = vmatprep.subr.mxu0 %v67
    %111 = vmatpush1.msra.mxu0 %v66
    %112 = vmatprep.subr.mxu0 %v69
    %113 = vmatpush1.msra.mxu0 %v68
    %114 = vmatprep.subr.mxu0 %v71
    %115 = vmatpush1.msra.mxu0 %v70
    %116 = vmatprep.subr.mxu0 %v73
    %117 = vmatpush1.msra.mxu0 %v72
    %118 = vmatprep.subr.mxu0 0.0
    %119 = vmatpush1.msra.mxu0 0.0
    %120 = vmatprep.subr.mxu0 0.0
    %121 = vmatpush1.msra.mxu0 0.0
    %122 = vmatprep.subr.mxu0 0.0
    %123 = vmatpush1.msra.mxu0 0.0
    %124 = vmatprep.subr.mxu0 0.0
    %125 = vmatpush1.msra.mxu0 0.0
    %126 = vmatprep.subr.mxu0 0.0
    %127 = vmatpush1.msra.mxu0 0.0
    %128 = vmatprep.subr.mxu0 0.0
    %129 = vmatpush1.msra.mxu0 0.0
    %130 = vmatprep.subr.mxu0 0.0
    %131 = vmatpush1.msra.mxu0 0.0
    %132 = vmatprep.subr.mxu0 0.0
    %133 = vmatpush1.msra.mxu0 0.0
    %134 = vmatprep.subr.mxu0 0.0
    %135 = vmatpush1.msra.mxu0 0.0
    %136 = vmatprep.subr.mxu0 0.0
    %137 = vmatpush1.msra.mxu0 0.0
    %138 = vmatprep.subr.mxu0 0.0
    %139 = vmatpush1.msra.mxu0 0.0
    %140 = vmatprep.subr.mxu0 0.0
    %141 = vmatpush1.msra.mxu0 0.0
    %142 = vmatprep.subr.mxu0 0.0
    %143 = vmatpush1.msra.mxu0 0.0
    %144 = vmatprep.subr.mxu0 0.0
    %145 = vmatpush1.msra.mxu0 0.0
    %146 = vmatprep.subr.mxu0 0.0
    %147 = vmatpush1.msra.mxu0 0.0
    %148 = vmatprep.subr.mxu0 0.0
    %149 = vmatpush1.msra.mxu0 0.0
    %150 = vmatprep.mubr.f32.mxu0 0.0
    %151 = vmatmul.mubr.f32.gmra.mrb[0].mxu0 %v41
    %v152 = vpop.f32.mrb[0].mxu0
    %v153 = vadd.f32 %v79, %v152
    %v154 = vpop.f32.mrb[0].mxu0
    %v155 = vadd.f32 %v83, %v154
    %156 = vdwg.mxu0
    %v157 = vmax.f32 %v153, 0.0
    %v158 = vsub.f32 0.0, %v155
    %v159 = vmul.f32 %v158, 1.442695
    %v160 = vpow.pop %v159
    %v161 = vadd.f32 %v160, 1.0
    %v162 = vrcp.pop %v161
    %v163 = vmul.f32 %v157, %v162
    %v164 = vsub.f32 1.0, %v162
    %v165 = vmul.f32 %v41, %v164
    %v166 = vadd.f32 %v163, %v165
    %167 = vst [vmem:[#allocation7] sm:$0xff] %v166
    // Predicated region
    $region22: #{tpu_custom_call.1} parent=1 // pred_check
      _
    $region23: #{tpu_custom_call.1} parent=1 // pred_check_branch
      %169 = sbr.rel (0) target = $region25
    $region24: #{tpu_custom_call.1} parent=1 // pred_region
      %s171 = ssub.s32 128, 128
      %172 = vsyncadd [#allocation4], %s171
      %s174 = sshll.u32 [#allocation7], 4
      %s175 = int_to_ptr.vmem [resolvable:$true] %s174
      %177 = dma.vmem_to_hbm [thread:$0]  %s175, 128, %s3, [#allocation4]
    $region25: #{tpu_custom_call.1} parent=1 // pred_fallthru
      _
    // Predicated region
    $region26: #{tpu_custom_call.1} parent=1 // pred_check
      _
    $region27: #{tpu_custom_call.1} parent=1 // pred_check_branch
      %179 = sbr.rel (0) target = $region29
    $region28: #{tpu_custom_call.1} parent=1 // pred_region
      %180 = dma.done [#allocation4], 128
    $region29: #{tpu_custom_call.1} parent=1 // pred_fallthru
      _
    %181 = vsyncpa [#allocation3], 1
    %182 = vsyncpa [#allocation6], 1
    %183 = vsyncpa [#allocation4], 1

</llo_original>
